<compile_context>
chip_gen: v7x
topology: tpu7x:2x2x1
jax: 0.10.0
libtpu: 0.0.40
codegen_flags: <defaults>
</compile_context>

<pallas_src>
import functools

import jax
import jax.numpy as jnp
from jax.experimental import pallas as pl
from jax.experimental.pallas import tpu as pltpu


def _bilstm_kernel(Tc, H,
                   gxf_ref, gxb_ref,      # (Tc, Bp, 4H) precomputed x-gates
                   wblk_ref,              # (2H, 8H) block-diag recurrent weight
                   wcls_ref,              # (2, H)  classifier weight halves
                   bcls_ref,              # (1,)    classifier bias (SMEM)
                   out_ref,               # (Bp, 128) lane-dense output slab
                   h_cat, c_f, c_b):      # f32 state scratch
    """One grid step = Tc timesteps of the fwd AND bwd recurrence (fused)."""
    chunk = pl.program_id(0)
    n_chunks = pl.num_programs(0)

    @pl.when(chunk == 0)
    def _():
        h_cat[...] = jnp.zeros_like(h_cat)
        c_f[...] = jnp.zeros_like(c_f)
        c_b[...] = jnp.zeros_like(c_b)

    # Load the (small) recurrent weight once per grid step.
    w_blk = wblk_ref[...]

    def halfcell(gates, c):
        # gates: (Bp, 4H), column order [i | f | o | g]
        sig = jax.nn.sigmoid(gates[:, :3 * H])        # one EUP dispatch (3H)
        g_g = jnp.tanh(gates[:, 3 * H:])              # one EUP dispatch (H)
        i_g = sig[:, 0 * H:1 * H]
        f_g = sig[:, 1 * H:2 * H]
        o_g = sig[:, 2 * H:3 * H]
        c_new = f_g * c + i_g * g_g
        h_new = o_g * jnp.tanh(c_new)
        return h_new, c_new

    def step(i, carry):
        hc, cf, cb = carry
        # Single fused MXU issue for BOTH directions: (Bp,2H) @ (2H,8H).
        rec = jnp.dot(hc.astype(w_blk.dtype), w_blk,
                      preferred_element_type=jnp.float32)        # (Bp, 8H)
        # Backward gates: chunk already time-reversed via index_map; walk the
        # chunk backwards so the bwd direction consumes t = S-1 ... 0.
        gates_f = gxf_ref[i].astype(jnp.float32) + rec[:, :4 * H]
        gates_b = gxb_ref[Tc - 1 - i].astype(jnp.float32) + rec[:, 4 * H:]
        hf, cf = halfcell(gates_f, cf)
        hb, cb = halfcell(gates_b, cb)
        return jnp.concatenate([hf, hb], axis=-1), cf, cb

    carry0 = (h_cat[...], c_f[...], c_b[...])
    hc, cf, cb = jax.lax.fori_loop(0, Tc, step, carry0,
                                   unroll=min(8, Tc))
    h_cat[...] = hc
    c_f[...] = cf
    c_b[...] = cb

    @pl.when(chunk == n_chunks - 1)
    def _():
        # classifier on concat([h_fwd_final, h_bwd_final]) fused as two
        # elementwise-mul + lane reductions, written to a lane-dense slab
        # (sliced to column 0 in the wrapper).
        hf = hc[:, :H]
        hb = hc[:, H:]
        logits = (jnp.sum(hf * wcls_ref[0:1, :], axis=-1, keepdims=True)
                  + jnp.sum(hb * wcls_ref[1:2, :], axis=-1, keepdims=True)
                  + bcls_ref[0])
        out_ref[...] = jnp.broadcast_to(jax.nn.sigmoid(logits), out_ref.shape)


def init_params(key, vocab_size, hidden_size):
    H = hidden_size
    ks = jax.random.split(key, 11)
    scale = 1.0 / jnp.sqrt(jnp.float32(H))

    def u(k, shape):
        return jax.random.uniform(k, shape, jnp.float32, -scale, scale)

    return {
        "embedding": 0.1 * jax.random.normal(ks[0], (vocab_size, H), jnp.float32),
        "w_ih_f": u(ks[1], (4 * H, H)),
        "w_hh_f": u(ks[2], (4 * H, H)),
        "b_ih_f": u(ks[3], (4 * H,)),
        "b_hh_f": u(ks[4], (4 * H,)),
        "w_ih_b": u(ks[5], (4 * H, H)),
        "w_hh_b": u(ks[6], (4 * H, H)),
        "b_ih_b": u(ks[7], (4 * H,)),
        "b_hh_b": u(ks[8], (4 * H,)),
        "w_cls": u(ks[9], (1, 2 * H)),
        "b_cls": u(ks[10], (1,)),
    }


def _pick_time_chunk(S, Bp, H, dtype_bytes, vmem_budget_bytes=8 << 20):
    """Largest divisor of S with Nc >= 4 (when possible), Tc <= 64, and the
    double-buffered gate tiles (2 dirs x 2 buffers) within a VMEM budget that
    is safe even on v7x's 64 MiB VMEM."""
    per_step_bytes = 2 * 2 * Bp * 4 * H * dtype_bytes
    cap = max(1, vmem_budget_bytes // per_step_bytes)
    cap = min(cap, 64)
    divs = [d for d in range(1, S + 1) if S % d == 0]
    cands = [d for d in divs if d <= cap and S // d >= 4]
    if not cands:
        cands = [d for d in divs if d <= cap] or [1]
    return max(cands)


def _reorder_gates(w):
    """PyTorch gate order [i, f, g, o] along axis 0 -> [i, f, o, g]."""
    H = w.shape[0] // 4
    return jnp.concatenate([w[:2 * H], w[3 * H:4 * H], w[2 * H:3 * H]], axis=0)


def bilstm_forward(tokens, params, *, time_chunk=None,
                   compute_dtype=jnp.float32):
    """tokens: (B, S) int32 -> (B,) float32 probabilities.

    compute_dtype: dtype of the streamed gate tiles and recurrent weight
    (use jnp.bfloat16 on v6e/v7x; loosen the numeric tolerance accordingly).
    Gate math / h / c state always stay f32.
    """
    emb_table = params["embedding"]
    H = emb_table.shape[1]
    B, S = tokens.shape
    Bp = max(8, -(-B // 8) * 8)                 # pad batch to sublane multiple
    assert (4 * H) % 128 == 0, "4*H must be a multiple of 128 lanes"

    dtype_bytes = jnp.dtype(compute_dtype).itemsize
    Tc = (_pick_time_chunk(S, Bp, H, dtype_bytes)
          if time_chunk is None else time_chunk)
    assert S % Tc == 0, "time_chunk must divide the sequence length"
    Nc = S // Tc

    # ---- glue: embedding lookup, batch padding, time-major layout ----
    emb = jnp.take(emb_table, tokens, axis=0)                  # (B, S, H)
    emb = jnp.pad(emb, ((0, Bp - B), (0, 0), (0, 0)))          # (Bp, S, H)
    x_tm = jnp.transpose(emb, (1, 0, 2))                       # (S, Bp, H)

    # ---- reorder gates to [i, f, o, g] once at setup ----
    wih_f = _reorder_gates(params["w_ih_f"])                   # (4H, H)
    wih_b = _reorder_gates(params["w_ih_b"])
    whh_f = _reorder_gates(params["w_hh_f"])
    whh_b = _reorder_gates(params["w_hh_b"])
    b_f = _reorder_gates(params["b_ih_f"] + params["b_hh_f"])  # (4H,)
    b_b = _reorder_gates(params["b_ih_b"] + params["b_hh_b"])

    # ---- hoisted input projection: ONE big matmul for both directions,
    #      biases folded in; x is read from HBM once ----
    w_ih_all = jnp.concatenate([wih_f, wih_b], axis=0)         # (8H, H)
    b_all = jnp.concatenate([b_f, b_b])                        # (8H,)
    gx_all = jnp.einsum("sbh,gh->sbg",
                        x_tm.astype(compute_dtype),
                        w_ih_all.astype(compute_dtype),
                        preferred_element_type=jnp.float32) + b_all
    gx_all = gx_all.astype(compute_dtype)                      # (S, Bp, 8H)

    # ---- fused recurrent weight: block_diag(W_hh_f^T, W_hh_b^T) (2H, 8H) ----
    zeros = jnp.zeros((H, 4 * H), jnp.float32)
    w_blk = jnp.concatenate(
        [jnp.concatenate([whh_f.T, zeros], axis=1),
         jnp.concatenate([zeros, whh_b.T], axis=1)],
        axis=0).astype(compute_dtype)                          # (2H, 8H)

    wcls = params["w_cls"].reshape(2, H)       # row0 = fwd half, row1 = bwd half
    bcls = params["b_cls"].reshape(1)

    out = pl.pallas_call(
        functools.partial(_bilstm_kernel, Tc, H),
        out_shape=jax.ShapeDtypeStruct((Bp, 128), jnp.float32),
        grid_spec=pltpu.PrefetchScalarGridSpec(
            num_scalar_prefetch=0,
            grid=(Nc,),
            in_specs=[
                # fwd gates: chunk c, columns 0:4H of gx_all
                pl.BlockSpec((Tc, Bp, 4 * H), lambda c: (c, 0, 0)),
                # bwd gates: time-reversed chunk, columns 4H:8H of gx_all
                pl.BlockSpec((Tc, Bp, 4 * H), lambda c: (Nc - 1 - c, 0, 1)),
                pl.BlockSpec((2 * H, 8 * H), lambda c: (0, 0)),   # W_blk
                pl.BlockSpec((2, H), lambda c: (0, 0)),           # classifier W
                pl.BlockSpec(memory_space=pltpu.MemorySpace.SMEM),  # classifier b
            ],
            out_specs=pl.BlockSpec((Bp, 128), lambda c: (0, 0)),
            scratch_shapes=[
                pltpu.VMEM((Bp, 2 * H), jnp.float32),   # h_cat
                pltpu.VMEM((Bp, H), jnp.float32),       # c_f
                pltpu.VMEM((Bp, H), jnp.float32),       # c_b
            ]),
        compiler_params=pltpu.CompilerParams(
            dimension_semantics=("arbitrary",)),   # serial recurrence over chunks
    )(gx_all, gx_all, w_blk, wcls, bcls)

    return out[:B, 0]


def bilstm_reference(tokens, params):
    """Pure-JAX reference mirroring PyTorch nn.LSTM semantics."""
    emb_table = params["embedding"]
    H = emb_table.shape[1]
    B, S = tokens.shape
    emb = jnp.take(emb_table, tokens, axis=0)          # (B, S, H)

    def cell(x, h, c, wih, whh, b_ih, b_hh):
        gates = x @ wih.T + h @ whh.T + b_ih + b_hh
        i = jax.nn.sigmoid(gates[:, 0 * H:1 * H])
        f = jax.nn.sigmoid(gates[:, 1 * H:2 * H])
        g = jnp.tanh(gates[:, 2 * H:3 * H])
        o = jax.nn.sigmoid(gates[:, 3 * H:4 * H])
        c = f * c + i * g
        h = o * jnp.tanh(c)
        return h, c

    h_f = jnp.zeros((B, H), jnp.float32)
    c_f = jnp.zeros((B, H), jnp.float32)
    for t in range(S):
        h_f, c_f = cell(emb[:, t], h_f, c_f, params["w_ih_f"], params["w_hh_f"],
                        params["b_ih_f"], params["b_hh_f"])

    h_b = jnp.zeros((B, H), jnp.float32)
    c_b = jnp.zeros((B, H), jnp.float32)
    for t in reversed(range(S)):
        h_b, c_b = cell(emb[:, t], h_b, c_b, params["w_ih_b"], params["w_hh_b"],
                        params["b_ih_b"], params["b_hh_b"])

    concat = jnp.concatenate([h_f, h_b], axis=1)       # (B, 2H)
    logits = concat @ params["w_cls"].T + params["b_cls"]
    return jax.nn.sigmoid(logits[:, 0])


if __name__ == "__main__":
    VOCAB, B, S, H = 50, 2, 8, 32

    key = jax.random.PRNGKey(0)
    k_params, k_tok = jax.random.split(key)
    params = init_params(k_params, VOCAB, H)
    tokens = jax.random.randint(k_tok, (B, S), 0, VOCAB, dtype=jnp.int32)

    out = jax.block_until_ready(bilstm_forward(tokens, params))
    ref = jax.block_until_ready(bilstm_reference(tokens, params))

    assert out.shape == (B,)
    assert jnp.allclose(out, ref, atol=1e-4, rtol=1e-4), (out, ref)
    print("KERNEL_OK")
</pallas_src>

<mosaic_0001>
module attributes {stable_mosaic.version = 11 : i64} {
  func.func @_bilstm_kernel(%arg0: i32, %arg1: memref<2x8x128xf32, #tpu.memory_space<vmem>>, %arg2: memref<2x8x128xf32, #tpu.memory_space<vmem>>, %arg3: memref<64x256xf32, #tpu.memory_space<vmem>>, %arg4: memref<2x32xf32, #tpu.memory_space<vmem>>, %arg5: memref<1xf32, #tpu.memory_space<smem>>, %arg6: memref<8x128xf32, #tpu.memory_space<vmem>>, %arg7: memref<8x64xf32, #tpu.memory_space<vmem>>, %arg8: memref<8x32xf32, #tpu.memory_space<vmem>>, %arg9: memref<8x32xf32, #tpu.memory_space<vmem>>) attributes {dimension_semantics = [#tpu.dimension_semantics<arbitrary>], iteration_bounds = array<i64: 4>, scalar_prefetch = 0 : i64, scratch_operands = 3 : i64, tpu.core_type = #tpu.core_type<tc>, window_params = [{transform_indices = @transform_0, window_bounds = array<i64: 2, 8, 128>}, {transform_indices = @transform_1, window_bounds = array<i64: 2, 8, 128>}, {pipeline_mode = #tpu.pipeline_mode<synchronous>, transform_indices = @transform_2, window_bounds = array<i64: 64, 256>}, {pipeline_mode = #tpu.pipeline_mode<synchronous>, transform_indices = @transform_3, window_bounds = array<i64: 2, 32>}, {transform_indices = @transform_4, window_bounds = array<i64: 1>}, {pipeline_mode = #tpu.pipeline_mode<synchronous>, transform_indices = @transform_5, window_bounds = array<i64: 8, 128>}]} {
    %c0_i32 = arith.constant 0 : i32
    %0 = arith.cmpi eq, %arg0, %c0_i32 : i32
    %1 = arith.extui %0 : i1 to i32
    %c0_i32_0 = arith.constant 0 : i32
    %2 = arith.cmpi ne, %1, %c0_i32_0 : i32
    scf.if %2 {
      %cst_31 = arith.constant 0.000000e+00 : f32
      %103 = vector.broadcast %cst_31 : f32 to vector<8x64xf32>
      %c0_32 = arith.constant 0 : index
      %c0_33 = arith.constant 0 : index
      %104 = vector.load %arg7[%c0_32, %c0_33] : memref<8x64xf32, #tpu.memory_space<vmem>>, vector<8x64xf32>
      tpu.vector_store %arg7[%c0_32, %c0_33], %103 {strides = array<i32>} : memref<8x64xf32, #tpu.memory_space<vmem>>, vector<8x64xf32>,
      %cst_34 = arith.constant 0.000000e+00 : f32
      %105 = vector.broadcast %cst_34 : f32 to vector<8x32xf32>
      %c0_35 = arith.constant 0 : index
      %c0_36 = arith.constant 0 : index
      %106 = vector.load %arg8[%c0_35, %c0_36] : memref<8x32xf32, #tpu.memory_space<vmem>>, vector<8x32xf32>
      tpu.vector_store %arg8[%c0_35, %c0_36], %105 {strides = array<i32>} : memref<8x32xf32, #tpu.memory_space<vmem>>, vector<8x32xf32>,
      %cst_37 = arith.constant 0.000000e+00 : f32
      %107 = vector.broadcast %cst_37 : f32 to vector<8x32xf32>
      %c0_38 = arith.constant 0 : index
      %c0_39 = arith.constant 0 : index
      %108 = vector.load %arg9[%c0_38, %c0_39] : memref<8x32xf32, #tpu.memory_space<vmem>>, vector<8x32xf32>
      tpu.vector_store %arg9[%c0_38, %c0_39], %107 {strides = array<i32>} : memref<8x32xf32, #tpu.memory_space<vmem>>, vector<8x32xf32>,
    } else {
    }
    %c0 = arith.constant 0 : index
    %c0_1 = arith.constant 0 : index
    %3 = vector.load %arg3[%c0, %c0_1] : memref<64x256xf32, #tpu.memory_space<vmem>>, vector<64x256xf32>
    %c0_2 = arith.constant 0 : index
    %c0_3 = arith.constant 0 : index
    %4 = vector.load %arg7[%c0_2, %c0_3] : memref<8x64xf32, #tpu.memory_space<vmem>>, vector<8x64xf32>
    %c0_4 = arith.constant 0 : index
    %c0_5 = arith.constant 0 : index
    %5 = vector.load %arg8[%c0_4, %c0_5] : memref<8x32xf32, #tpu.memory_space<vmem>>, vector<8x32xf32>
    %c0_6 = arith.constant 0 : index
    %c0_7 = arith.constant 0 : index
    %6 = vector.load %arg9[%c0_6, %c0_7] : memref<8x32xf32, #tpu.memory_space<vmem>>, vector<8x32xf32>
    %c0_i32_8 = arith.constant 0 : i32
    %cst = arith.constant dense<0.000000e+00> : vector<8x256xf32>
    %7 = tpu.matmul %4, %3, %cst {dimension_numbers = #tpu.dot_dimension_numbers<[1], [0], [0], [1], [0, 0, 1, 1], [], []>} : vector<8x64xf32>, vector<64x256xf32>, vector<8x256xf32> -> vector<8x256xf32>
    %8 = arith.index_cast %c0_i32_8 : i32 to index
    %c0_9 = arith.constant 0 : index
    %c0_10 = arith.constant 0 : index
    %9 = vector.load %arg1[%8, %c0_9, %c0_10] : memref<2x8x128xf32, #tpu.memory_space<vmem>>, vector<1x8x128xf32>
    %10 = vector.shape_cast %9 : vector<1x8x128xf32> to vector<8x128xf32>
    %11 = vector.extract_strided_slice %7 {offsets = [0, 0], sizes = [8, 128], strides = [1, 1]} : vector<8x256xf32> to vector<8x128xf32>
    %12 = arith.addf %10, %11 : vector<8x128xf32>
    %c1_i32 = arith.constant 1 : i32
    %13 = arith.subi %c1_i32, %c0_i32_8 : i32
    %14 = arith.index_cast %13 : i32 to index
    %c0_11 = arith.constant 0 : index
    %c0_12 = arith.constant 0 : index
    %15 = vector.load %arg2[%14, %c0_11, %c0_12] : memref<2x8x128xf32, #tpu.memory_space<vmem>>, vector<1x8x128xf32>
    %16 = vector.shape_cast %15 : vector<1x8x128xf32> to vector<8x128xf32>
    %17 = vector.extract_strided_slice %7 {offsets = [0, 128], sizes = [8, 128], strides = [1, 1]} : vector<8x256xf32> to vector<8x128xf32>
    %18 = arith.addf %16, %17 : vector<8x128xf32>
    %19 = vector.extract_strided_slice %12 {offsets = [0, 0], sizes = [8, 96], strides = [1, 1]} : vector<8x128xf32> to vector<8x96xf32>
    %20 = arith.negf %19 : vector<8x96xf32>
    %21 = math.exp %20 : vector<8x96xf32>
    %cst_13 = arith.constant 1.000000e+00 : f32
    %22 = vector.broadcast %cst_13 : f32 to vector<8x96xf32>
    %23 = arith.addf %22, %21 : vector<8x96xf32>
    %24 = arith.divf %22, %23 : vector<8x96xf32>
    %25 = vector.extract_strided_slice %12 {offsets = [0, 96], sizes = [8, 32], strides = [1, 1]} : vector<8x128xf32> to vector<8x32xf32>
    %26 = math.tanh %25 : vector<8x32xf32>
    %27 = vector.extract_strided_slice %24 {offsets = [0, 0], sizes = [8, 32], strides = [1, 1]} : vector<8x96xf32> to vector<8x32xf32>
    %28 = vector.extract_strided_slice %24 {offsets = [0, 32], sizes = [8, 32], strides = [1, 1]} : vector<8x96xf32> to vector<8x32xf32>
    %29 = vector.extract_strided_slice %24 {offsets = [0, 64], sizes = [8, 32], strides = [1, 1]} : vector<8x96xf32> to vector<8x32xf32>
    %30 = arith.mulf %28, %5 : vector<8x32xf32>
    %31 = arith.mulf %27, %26 : vector<8x32xf32>
    %32 = arith.addf %30, %31 : vector<8x32xf32>
    %33 = math.tanh %32 : vector<8x32xf32>
    %34 = arith.mulf %29, %33 : vector<8x32xf32>
    %35 = vector.extract_strided_slice %18 {offsets = [0, 0], sizes = [8, 96], strides = [1, 1]} : vector<8x128xf32> to vector<8x96xf32>
    %36 = arith.negf %35 : vector<8x96xf32>
    %37 = math.exp %36 : vector<8x96xf32>
    %cst_14 = arith.constant 1.000000e+00 : f32
    %38 = vector.broadcast %cst_14 : f32 to vector<8x96xf32>
    %39 = arith.addf %38, %37 : vector<8x96xf32>
    %40 = arith.divf %38, %39 : vector<8x96xf32>
    %41 = vector.extract_strided_slice %18 {offsets = [0, 96], sizes = [8, 32], strides = [1, 1]} : vector<8x128xf32> to vector<8x32xf32>
    %42 = math.tanh %41 : vector<8x32xf32>
    %43 = vector.extract_strided_slice %40 {offsets = [0, 0], sizes = [8, 32], strides = [1, 1]} : vector<8x96xf32> to vector<8x32xf32>
    %44 = vector.extract_strided_slice %40 {offsets = [0, 32], sizes = [8, 32], strides = [1, 1]} : vector<8x96xf32> to vector<8x32xf32>
    %45 = vector.extract_strided_slice %40 {offsets = [0, 64], sizes = [8, 32], strides = [1, 1]} : vector<8x96xf32> to vector<8x32xf32>
    %46 = arith.mulf %44, %6 : vector<8x32xf32>
    %47 = arith.mulf %43, %42 : vector<8x32xf32>
    %48 = arith.addf %46, %47 : vector<8x32xf32>
    %49 = math.tanh %48 : vector<8x32xf32>
    %50 = arith.mulf %45, %49 : vector<8x32xf32>
    %51 = tpu.concatenate %34, %50 in 1 : vector<8x32xf32>, vector<8x32xf32> -> vector<8x64xf32>
    %c1_i32_15 = arith.constant 1 : i32
    %cst_16 = arith.constant dense<0.000000e+00> : vector<8x256xf32>
    %52 = tpu.matmul %51, %3, %cst_16 {dimension_numbers = #tpu.dot_dimension_numbers<[1], [0], [0], [1], [0, 0, 1, 1], [], []>} : vector<8x64xf32>, vector<64x256xf32>, vector<8x256xf32> -> vector<8x256xf32>
    %53 = arith.index_cast %c1_i32_15 : i32 to index
    %c0_17 = arith.constant 0 : index
    %c0_18 = arith.constant 0 : index
    %54 = vector.load %arg1[%53, %c0_17, %c0_18] : memref<2x8x128xf32, #tpu.memory_space<vmem>>, vector<1x8x128xf32>
    %55 = vector.shape_cast %54 : vector<1x8x128xf32> to vector<8x128xf32>
    %56 = vector.extract_strided_slice %52 {offsets = [0, 0], sizes = [8, 128], strides = [1, 1]} : vector<8x256xf32> to vector<8x128xf32>
    %57 = arith.addf %55, %56 : vector<8x128xf32>
    %c1_i32_19 = arith.constant 1 : i32
    %58 = arith.subi %c1_i32_19, %c1_i32_15 : i32
    %59 = arith.index_cast %58 : i32 to index
    %c0_20 = arith.constant 0 : index
    %c0_21 = arith.constant 0 : index
    %60 = vector.load %arg2[%59, %c0_20, %c0_21] : memref<2x8x128xf32, #tpu.memory_space<vmem>>, vector<1x8x128xf32>
    %61 = vector.shape_cast %60 : vector<1x8x128xf32> to vector<8x128xf32>
    %62 = vector.extract_strided_slice %52 {offsets = [0, 128], sizes = [8, 128], strides = [1, 1]} : vector<8x256xf32> to vector<8x128xf32>
    %63 = arith.addf %61, %62 : vector<8x128xf32>
    %64 = vector.extract_strided_slice %57 {offsets = [0, 0], sizes = [8, 96], strides = [1, 1]} : vector<8x128xf32> to vector<8x96xf32>
    %65 = arith.negf %64 : vector<8x96xf32>
    %66 = math.exp %65 : vector<8x96xf32>
    %cst_22 = arith.constant 1.000000e+00 : f32
    %67 = vector.broadcast %cst_22 : f32 to vector<8x96xf32>
    %68 = arith.addf %67, %66 : vector<8x96xf32>
    %69 = arith.divf %67, %68 : vector<8x96xf32>
    %70 = vector.extract_strided_slice %57 {offsets = [0, 96], sizes = [8, 32], strides = [1, 1]} : vector<8x128xf32> to vector<8x32xf32>
    %71 = math.tanh %70 : vector<8x32xf32>
    %72 = vector.extract_strided_slice %69 {offsets = [0, 0], sizes = [8, 32], strides = [1, 1]} : vector<8x96xf32> to vector<8x32xf32>
    %73 = vector.extract_strided_slice %69 {offsets = [0, 32], sizes = [8, 32], strides = [1, 1]} : vector<8x96xf32> to vector<8x32xf32>
    %74 = vector.extract_strided_slice %69 {offsets = [0, 64], sizes = [8, 32], strides = [1, 1]} : vector<8x96xf32> to vector<8x32xf32>
    %75 = arith.mulf %73, %32 : vector<8x32xf32>
    %76 = arith.mulf %72, %71 : vector<8x32xf32>
    %77 = arith.addf %75, %76 : vector<8x32xf32>
    %78 = math.tanh %77 : vector<8x32xf32>
    %79 = arith.mulf %74, %78 : vector<8x32xf32>
    %80 = vector.extract_strided_slice %63 {offsets = [0, 0], sizes = [8, 96], strides = [1, 1]} : vector<8x128xf32> to vector<8x96xf32>
    %81 = arith.negf %80 : vector<8x96xf32>
    %82 = math.exp %81 : vector<8x96xf32>
    %cst_23 = arith.constant 1.000000e+00 : f32
    %83 = vector.broadcast %cst_23 : f32 to vector<8x96xf32>
    %84 = arith.addf %83, %82 : vector<8x96xf32>
    %85 = arith.divf %83, %84 : vector<8x96xf32>
    %86 = vector.extract_strided_slice %63 {offsets = [0, 96], sizes = [8, 32], strides = [1, 1]} : vector<8x128xf32> to vector<8x32xf32>
    %87 = math.tanh %86 : vector<8x32xf32>
    %88 = vector.extract_strided_slice %85 {offsets = [0, 0], sizes = [8, 32], strides = [1, 1]} : vector<8x96xf32> to vector<8x32xf32>
    %89 = vector.extract_strided_slice %85 {offsets = [0, 32], sizes = [8, 32], strides = [1, 1]} : vector<8x96xf32> to vector<8x32xf32>
    %90 = vector.extract_strided_slice %85 {offsets = [0, 64], sizes = [8, 32], strides = [1, 1]} : vector<8x96xf32> to vector<8x32xf32>
    %91 = arith.mulf %89, %48 : vector<8x32xf32>
    %92 = arith.mulf %88, %87 : vector<8x32xf32>
    %93 = arith.addf %91, %92 : vector<8x32xf32>
    %94 = math.tanh %93 : vector<8x32xf32>
    %95 = arith.mulf %90, %94 : vector<8x32xf32>
    %96 = tpu.concatenate %79, %95 in 1 : vector<8x32xf32>, vector<8x32xf32> -> vector<8x64xf32>
    %c2_i32 = arith.constant 2 : i32
    %c0_24 = arith.constant 0 : index
    %c0_25 = arith.constant 0 : index
    %97 = vector.load %arg7[%c0_24, %c0_25] : memref<8x64xf32, #tpu.memory_space<vmem>>, vector<8x64xf32>
    tpu.vector_store %arg7[%c0_24, %c0_25], %96 {strides = array<i32>} : memref<8x64xf32, #tpu.memory_space<vmem>>, vector<8x64xf32>,
    %c0_26 = arith.constant 0 : index
    %c0_27 = arith.constant 0 : index
    %98 = vector.load %arg8[%c0_26, %c0_27] : memref<8x32xf32, #tpu.memory_space<vmem>>, vector<8x32xf32>
    tpu.vector_store %arg8[%c0_26, %c0_27], %77 {strides = array<i32>} : memref<8x32xf32, #tpu.memory_space<vmem>>, vector<8x32xf32>,
    %c0_28 = arith.constant 0 : index
    %c0_29 = arith.constant 0 : index
    %99 = vector.load %arg9[%c0_28, %c0_29] : memref<8x32xf32, #tpu.memory_space<vmem>>, vector<8x32xf32>
    tpu.vector_store %arg9[%c0_28, %c0_29], %93 {strides = array<i32>} : memref<8x32xf32, #tpu.memory_space<vmem>>, vector<8x32xf32>,
    %c3_i32 = arith.constant 3 : i32
    %100 = arith.cmpi eq, %arg0, %c3_i32 : i32
    %101 = arith.extui %100 : i1 to i32
    %c0_i32_30 = arith.constant 0 : i32
    %102 = arith.cmpi ne, %101, %c0_i32_30 : i32
    scf.if %102 {
      %103 = vector.extract_strided_slice %96 {offsets = [0, 0], sizes = [8, 32], strides = [1, 1]} : vector<8x64xf32> to vector<8x32xf32>
      %104 = vector.extract_strided_slice %96 {offsets = [0, 32], sizes = [8, 32], strides = [1, 1]} : vector<8x64xf32> to vector<8x32xf32>
      %c0_31 = arith.constant 0 : index
      %c0_32 = arith.constant 0 : index
      %105 = vector.load %arg4[%c0_31, %c0_32] : memref<2x32xf32, #tpu.memory_space<vmem>>, vector<1x32xf32>
      %106 = vector.broadcast %105 : vector<1x32xf32> to vector<8x32xf32>
      %107 = arith.mulf %103, %106 : vector<8x32xf32>
      %cst_33 = arith.constant dense<0.000000e+00> : vector<8xf32>
      %108 = vector.multi_reduction <add>, %107, %cst_33 [1] : vector<8x32xf32> to vector<8xf32>
      %109 = vector.shape_cast %108 : vector<8xf32> to vector<8x1xf32>
      %c1 = arith.constant 1 : index
      %c0_34 = arith.constant 0 : index
      %110 = vector.load %arg4[%c1, %c0_34] : memref<2x32xf32, #tpu.memory_space<vmem>>, vector<1x32xf32>
      %111 = vector.broadcast %110 : vector<1x32xf32> to vector<8x32xf32>
      %112 = arith.mulf %104, %111 : vector<8x32xf32>
      %cst_35 = arith.constant dense<0.000000e+00> : vector<8xf32>
      %113 = vector.multi_reduction <add>, %112, %cst_35 [1] : vector<8x32xf32> to vector<8xf32>
      %114 = vector.shape_cast %113 : vector<8xf32> to vector<8x1xf32>
      %115 = arith.addf %109, %114 : vector<8x1xf32>
      %c0_36 = arith.constant 0 : index
      %116 = memref.load %arg5[%c0_36] : memref<1xf32, #tpu.memory_space<smem>>
      %117 = vector.broadcast %116 : f32 to vector<8x1xf32>
      %118 = arith.addf %115, %117 : vector<8x1xf32>
      %119 = arith.negf %118 : vector<8x1xf32>
      %120 = math.exp %119 : vector<8x1xf32>
      %cst_37 = arith.constant 1.000000e+00 : f32
      %121 = vector.broadcast %cst_37 : f32 to vector<8x1xf32>
      %122 = arith.addf %121, %120 : vector<8x1xf32>
      %123 = arith.divf %121, %122 : vector<8x1xf32>
      %124 = vector.shape_cast %123 : vector<8x1xf32> to vector<8x1xf32>
      %125 = vector.broadcast %124 : vector<8x1xf32> to vector<8x128xf32>
      %c0_38 = arith.constant 0 : index
      %c0_39 = arith.constant 0 : index
      %126 = vector.load %arg6[%c0_38, %c0_39] : memref<8x128xf32, #tpu.memory_space<vmem>>, vector<8x128xf32>
      tpu.vector_store %arg6[%c0_38, %c0_39], %125 {strides = array<i32>} : memref<8x128xf32, #tpu.memory_space<vmem>>, vector<8x128xf32>,
    } else {
    }
    return
  }
  func.func @transform_0(%arg0: i32) -> (i32, i32, i32) {
    %c0_i32 = arith.constant 0 : i32
    %c0_i32_0 = arith.constant 0 : i32
    %c0_i32_1 = arith.constant 0 : i32
    return %arg0, %c0_i32, %c0_i32_0 : i32, i32, i32
  }
  func.func @transform_1(%arg0: i32) -> (i32, i32, i32) {
    %c3_i32 = arith.constant 3 : i32
    %0 = arith.subi %c3_i32, %arg0 : i32
    %c0_i32 = arith.constant 0 : i32
    %c1_i32 = arith.constant 1 : i32
    %c0_i32_0 = arith.constant 0 : i32
    return %0, %c0_i32, %c1_i32 : i32, i32, i32
  }
  func.func @transform_2(%arg0: i32) -> (i32, i32) {
    %c0_i32 = arith.constant 0 : i32
    %c0_i32_0 = arith.constant 0 : i32
    %c0_i32_1 = arith.constant 0 : i32
    return %c0_i32, %c0_i32_0 : i32, i32
  }
  func.func @transform_3(%arg0: i32) -> (i32, i32) {
    %c0_i32 = arith.constant 0 : i32
    %c0_i32_0 = arith.constant 0 : i32
    %c0_i32_1 = arith.constant 0 : i32
    return %c0_i32, %c0_i32_0 : i32, i32
  }
  func.func @transform_4(%arg0: i32) -> i32 {
    %c0_i32 = arith.constant 0 : i32
    %c0_i32_0 = arith.constant 0 : i32
    return %c0_i32 : i32
  }
  func.func @transform_5(%arg0: i32) -> (i32, i32) {
    %c0_i32 = arith.constant 0 : i32
    %c0_i32_0 = arith.constant 0 : i32
    %c0_i32_1 = arith.constant 0 : i32
    return %c0_i32, %c0_i32_0 : i32, i32
  }
}

</mosaic_0001>

<llo_original>
// kernel: tpu_custom_call.1
$region0: #{tpu_custom_call.1}
  #allocation0 [shape = 'u32[]', space=smem, size = 0x4, offset = 0x4, fixed_abs, tag = 'smem constant byte address 0x4 - core index']
  #allocation1 [shape = 'u32[144,128]{1,0:T(1,128)}', space=vmem, size = 0x12000, scoped, tag = 'internal scratch']
  #allocation2 [shape = 'f32[8,64]{1,0:T(8,128)}', space=vmem, size = 0x1000, scoped, tag = 'scratch operand']
  #allocation3 [shape = 'f32[8,32]{1,0:T(8,128)}', space=vmem, size = 0x1000, scoped, tag = 'scratch operand']
  #allocation4 [shape = 'f32[8,32]{1,0:T(8,128)}', space=vmem, size = 0x1000, scoped, tag = 'scratch operand']
  #allocation5 [shape = 'f32[1]{0:T(128)S(6)}', space=smem, size = 0x200, scoped, tag = 'scoped memory for tpu_custom_call.1']
  %s0 = inlined_call_operand.hbm [shape: f32[8,8,256], index: 0, kind: input, shape index: {}]
  %s1 = inlined_call_operand.hbm [shape: f32[8,8,256], index: 1, kind: input, shape index: {}]
  %s2 = inlined_call_operand.hbm [shape: f32[64,256], index: 2, kind: input, shape index: {}]
  %s3 = inlined_call_operand.vmem [shape: f32[2,32], index: 3, kind: input, shape index: {}]
  %s4 = inlined_call_operand.<no memory space> [shape: f32[1], index: 4, kind: input, shape index: {}]
  %s5 = inlined_call_operand.hbm [shape: f32[8,128], index: 5, kind: output, shape index: {}]
  %s6 = sld [smem:[#allocation0]]
  $region73: #{tpu_custom_call.1} parent=0
    _
  %s8 = ssub.s32 1, %s6
  %s9 = scalar_select 0, %s8, %s6
  %10 = sst [smem:[#allocation5]] %s4
  $region1: #{tpu_custom_call.1} parent=0
    #allocation6 [shape = 'u8[16384]{0}', space=vmem, size = 0x4000, scoped, tag = 'input window, operand 0']
    #allocation7 [shape = 's32[2]{0}', space=sflag, size = 0x8, scoped, tag = 'scoped memory for tpu_custom_call.1']
    #allocation8 [shape = 's32[2]{0}', space=sflag, size = 0x8, scoped, tag = 'scoped memory for tpu_custom_call.1']
    #allocation9 [shape = 'u8[16384]{0}', space=vmem, size = 0x4000, scoped, tag = 'input window, operand 1']
    #allocation10 [shape = 's32[2]{0}', space=sflag, size = 0x8, scoped, tag = 'scoped memory for tpu_custom_call.1']
    #allocation11 [shape = 'u8[65536]{0}', space=vmem, size = 0x10000, scoped, tag = 'input window, operand 2, single buffered']
    #allocation12 [shape = 'u8[4096]{0}', space=vmem, size = 0x1000, scoped, tag = 'output window, operand 0, single buffered']
    %11 = vsyncpa [#allocation7], 0
    %s12 = scalar_lea.sflag [#allocation7], 1
    %13 = vsyncpa %s12, 0
    %14 = vsyncpa [#allocation10], 0
    %s15 = scalar_lea.sflag [#allocation10], 1
    %16 = vsyncpa %s15, 0
    %17 = vsyncpa [#allocation8], 0
    loop: start=0, step=1, limit=6
    $region2: #{tpu_custom_call.1} parent=1 // loop_pre_header
      _
    $region3: #{tpu_custom_call.1} parent=1 // loop_header
      %s19 = sphi 0, %s23
      %p20 = scmp.ge.s32.totalorder %s19, 6
      %s29 = sphi 0, %s31
      %s32 = sphi 0, %s29
      %s33 = sphi 0, %s32
      %s49 = sphi 0, %s33
      %s57 = sphi 0, %s59
      %s60 = sphi 0, %s57
      %s61 = sphi 0, %s60
      %s77 = sphi 0, %s61
      %s81 = sphi 0, %s81
      %s83 = sphi 0, %s81
      %s84 = sphi 0, %s83
      %s98 = sphi 0, %s84
      %s102 = sphi 0, %s102
      %s104 = sphi 0, %s102
      %s105 = sphi 0, %s104
      %s119 = sphi 0, %s105
      %s123 = sphi 0, %s123
      %s125 = sphi 0, %s123
      %s126 = sphi 0, %s125
      %s140 = sphi 0, %s126
      %s144 = sphi 0, %s144
      %s146 = sphi 0, %s144
      %s147 = sphi 0, %s146
      %s161 = sphi 0, %s147
    $region4: #{tpu_custom_call.1} parent=1 // loop_header_branch
      %22 = sbr.rel (%p20) target = $region8
    $region5: #{tpu_custom_call.1} parent=1 // loop_body
      %s24 = ssub.s32 %s19, 1
      %s25 = ssub.s32 %s19, 2
      %s26 = sadd.s32 %s19, 1
      %s27 = ssub.s32 %s19, %s26
      %p28 = scmp.eq.s32.totalorder %s27, 0
      %s30 = sadd.s32 %s29, 1
      %s31 = scalar_select %p28, %s29, %s30
      %p34 = pneg %p28
      %p35 = scmp.eq.s32.totalorder %s19, 3
      %p36 = por %p34, %p35
      %p37 = scmp.ne.s32.totalorder %s29, %s32
      %p38 = scmp.eq.s32.totalorder %s19, 0
      %p39 = por %p37, %p38
      %p40 = scmp.ne.s32.totalorder %s29, %s32
      %p41 = scmp.eq.s32.totalorder %s24, 3
      %p42 = por %p40, %p41
      %p43 = scmp.ne.s32.totalorder %s32, %s33
      %p44 = scmp.eq.s32.totalorder %s24, 0
      %p45 = por %p43, %p44
      %p46 = scmp.ne.s32.totalorder %s32, %s33
      %p47 = scmp.eq.s32.totalorder %s25, 3
      %p48 = por %p46, %p47
      %p50 = scmp.ne.s32.totalorder %s33, %s49
      %p51 = scmp.eq.s32.totalorder %s25, 0
      %p52 = por %p50, %p51
      %s53 = ssub.s32 3, %s19
      %s54 = ssub.s32 3, %s26
      %s55 = ssub.s32 %s53, %s54
      %p56 = scmp.eq.s32.totalorder %s55, 0
      %s58 = sadd.s32 %s57, 1
      %s59 = scalar_select %p56, %s57, %s58
      %p62 = pneg %p56
      %p63 = scmp.eq.s32.totalorder %s19, 3
      %p64 = por %p62, %p63
      %p65 = scmp.ne.s32.totalorder %s57, %s60
      %p66 = scmp.eq.s32.totalorder %s19, 0
      %p67 = por %p65, %p66
      %p68 = scmp.ne.s32.totalorder %s57, %s60
      %p69 = scmp.eq.s32.totalorder %s24, 3
      %p70 = por %p68, %p69
      %p71 = scmp.ne.s32.totalorder %s60, %s61
      %p72 = scmp.eq.s32.totalorder %s24, 0
      %p73 = por %p71, %p72
      %p74 = scmp.ne.s32.totalorder %s60, %s61
      %p75 = scmp.eq.s32.totalorder %s25, 3
      %p76 = por %p74, %p75
      %p78 = scmp.ne.s32.totalorder %s61, %s77
      %p79 = scmp.eq.s32.totalorder %s25, 0
      %p80 = por %p78, %p79
      %s82 = sadd.s32 %s81, 1
      %p85 = scmp.eq.s32.totalorder %s19, 3
      %p86 = scmp.ne.s32.totalorder %s81, %s83
      %p87 = scmp.eq.s32.totalorder %s19, 0
      %p88 = por %p86, %p87
      %p89 = scmp.ne.s32.totalorder %s81, %s83
      %p90 = scmp.eq.s32.totalorder %s24, 3
      %p91 = por %p89, %p90
      %p92 = scmp.ne.s32.totalorder %s83, %s84
      %p93 = scmp.eq.s32.totalorder %s24, 0
      %p94 = por %p92, %p93
      %p95 = scmp.ne.s32.totalorder %s83, %s84
      %p96 = scmp.eq.s32.totalorder %s25, 3
      %p97 = por %p95, %p96
      %p99 = scmp.ne.s32.totalorder %s84, %s98
      %p100 = scmp.eq.s32.totalorder %s25, 0
      %p101 = por %p99, %p100
      %s103 = sadd.s32 %s102, 1
      %p106 = scmp.eq.s32.totalorder %s19, 3
      %p107 = scmp.ne.s32.totalorder %s102, %s104
      %p108 = scmp.eq.s32.totalorder %s19, 0
      %p109 = por %p107, %p108
      %p110 = scmp.ne.s32.totalorder %s102, %s104
      %p111 = scmp.eq.s32.totalorder %s24, 3
      %p112 = por %p110, %p111
      %p113 = scmp.ne.s32.totalorder %s104, %s105
      %p114 = scmp.eq.s32.totalorder %s24, 0
      %p115 = por %p113, %p114
      %p116 = scmp.ne.s32.totalorder %s104, %s105
      %p117 = scmp.eq.s32.totalorder %s25, 3
      %p118 = por %p116, %p117
      %p120 = scmp.ne.s32.totalorder %s105, %s119
      %p121 = scmp.eq.s32.totalorder %s25, 0
      %p122 = por %p120, %p121
      %s124 = sadd.s32 %s123, 1
      %p127 = scmp.eq.s32.totalorder %s19, 3
      %p128 = scmp.ne.s32.totalorder %s123, %s125
      %p129 = scmp.eq.s32.totalorder %s19, 0
      %p130 = por %p128, %p129
      %p131 = scmp.ne.s32.totalorder %s123, %s125
      %p132 = scmp.eq.s32.totalorder %s24, 3
      %p133 = por %p131, %p132
      %p134 = scmp.ne.s32.totalorder %s125, %s126
      %p135 = scmp.eq.s32.totalorder %s24, 0
      %p136 = por %p134, %p135
      %p137 = scmp.ne.s32.totalorder %s125, %s126
      %p138 = scmp.eq.s32.totalorder %s25, 3
      %p139 = por %p137, %p138
      %p141 = scmp.ne.s32.totalorder %s126, %s140
      %p142 = scmp.eq.s32.totalorder %s25, 0
      %p143 = por %p141, %p142
      %s145 = sadd.s32 %s144, 1
      %p148 = scmp.eq.s32.totalorder %s19, 3
      %p149 = scmp.ne.s32.totalorder %s144, %s146
      %p150 = scmp.eq.s32.totalorder %s19, 0
      %p151 = por %p149, %p150
      %p152 = scmp.ne.s32.totalorder %s144, %s146
      %p153 = scmp.eq.s32.totalorder %s24, 3
      %p154 = por %p152, %p153
      %p155 = scmp.ne.s32.totalorder %s146, %s147
      %p156 = scmp.eq.s32.totalorder %s24, 0
      %p157 = por %p155, %p156
      %p158 = scmp.ne.s32.totalorder %s146, %s147
      %p159 = scmp.eq.s32.totalorder %s25, 3
      %p160 = por %p158, %p159
      %p162 = scmp.ne.s32.totalorder %s147, %s161
      %p163 = scmp.eq.s32.totalorder %s25, 0
      %p164 = por %p162, %p163
      %p165 = scmp.le.s32.totalorder 1, %s19
      %p166 = scmp.lt.s32.totalorder %s19, 5
      %p167 = pnand %p165, %p166
      %p168 = pneg %p167
      // Predicated region
      $region9: #{tpu_custom_call.1} parent=5 // pred_check
        _
      $region10: #{tpu_custom_call.1} parent=5 // pred_check_branch
        %170 = sbr.rel (%p167) target = $region12
      $region11: #{tpu_custom_call.1} parent=5 // pred_region
        %s171 = ssub.s32 %s19, 1
        // Predicated region
        $region13: #{tpu_custom_call.1} parent=11 // pred_check
          %p172 = pneg %p94
        $region14: #{tpu_custom_call.1} parent=11 // pred_check_branch
          %174 = sbr.rel (%p172) target = $region16
        $region15: #{tpu_custom_call.1} parent=11 // pred_region
          %s176 = ssub.s32 2048, 2048
          %177 = vsyncadd [#allocation10], %s176
          %s178 = sshll.u32 [#allocation11], 4
          %s179 = int_to_ptr.vmem [resolvable:$true] %s178
          %184 = dma.hbm_to_vmem [thread:$0]  %s2, 2048, %s179, [#allocation10], 256, 256, 16
        $region16: #{tpu_custom_call.1} parent=11 // pred_fallthru
          _
        // Predicated region
        $region17: #{tpu_custom_call.1} parent=11 // pred_check
          %p185 = pneg %p115
        $region18: #{tpu_custom_call.1} parent=11 // pred_check_branch
          %187 = sbr.rel (%p185) target = $region20
        $region19: #{tpu_custom_call.1} parent=11 // pred_region
          _
        $region20: #{tpu_custom_call.1} parent=11 // pred_fallthru
          _
        // Predicated region
        $region21: #{tpu_custom_call.1} parent=11 // pred_check
          %p188 = pneg %p136
        $region22: #{tpu_custom_call.1} parent=11 // pred_check_branch
          %190 = sbr.rel (%p188) target = $region24
        $region23: #{tpu_custom_call.1} parent=11 // pred_region
          _
        $region24: #{tpu_custom_call.1} parent=11 // pred_fallthru
          _
      $region12: #{tpu_custom_call.1} parent=5 // pred_fallthru
        _
      %p191 = scmp.lt.s32.totalorder %s19, 4
      // Predicated region
      $region25: #{tpu_custom_call.1} parent=5 // pred_check
        %p192 = pneg %p191
      $region26: #{tpu_custom_call.1} parent=5 // pred_check_branch
        %194 = sbr.rel (%p192) target = $region28
      $region27: #{tpu_custom_call.1} parent=5 // pred_region
        // Predicated region
        $region29: #{tpu_custom_call.1} parent=27 // pred_check
          %p195 = pneg %p39
        $region30: #{tpu_custom_call.1} parent=27 // pred_check_branch
          %197 = sbr.rel (%p195) target = $region32
        $region31: #{tpu_custom_call.1} parent=27 // pred_region
          %s198 = sand.u32 %s29, 1
          %s199 = scalar_lea.sflag [#allocation7], %s198
          %s200 = sand.u32 %s29, 1
          %s201 = smul.addr %s200, 16
          %s202 = scalar_lea.vmem [#allocation6], %s201
          %s203 = smul.u32 2, %s19
          %s205 = ssub.s32 256, 256
          %206 = vsyncadd %s199, %s205
          %s207 = smul.addr %s203, 2
          %s208 = smul.addr %s207, 128
          %s209 = scalar_lea.hbm %s0, %s208
          %s210 = sshll.u32 %s202, 4
          %s211 = int_to_ptr.vmem [resolvable:$true] %s210
          %216 = dma.hbm_to_vmem [thread:$0]  %s209, 256, %s211, %s199, 256, 128, 8
        $region32: #{tpu_custom_call.1} parent=27 // pred_fallthru
          _
        // Predicated region
        $region33: #{tpu_custom_call.1} parent=27 // pred_check
          %p217 = pneg %p67
        $region34: #{tpu_custom_call.1} parent=27 // pred_check_branch
          %219 = sbr.rel (%p217) target = $region36
        $region35: #{tpu_custom_call.1} parent=27 // pred_region
          %s220 = sand.u32 %s19, 1
          %s221 = scalar_lea.sflag [#allocation10], %s220
          %s222 = sand.u32 %s57, 1
          %s223 = smul.addr %s222, 16
          %s224 = scalar_lea.vmem [#allocation9], %s223
          %s225 = ssub.s32 3, %s19
          %s226 = smul.u32 2, %s225
          %s228 = ssub.s32 256, 256
          %229 = vsyncadd %s221, %s228
          %s230 = smul.addr %s226, 2
          %s231 = sadd.s32 1, %s230
          %s232 = smul.addr %s231, 128
          %s233 = scalar_lea.hbm %s1, %s232
          %s234 = sshll.u32 %s224, 4
          %s235 = int_to_ptr.vmem [resolvable:$true] %s234
          %240 = dma.hbm_to_vmem [thread:$0]  %s233, 256, %s235, %s221, 256, 128, 8
        $region36: #{tpu_custom_call.1} parent=27 // pred_fallthru
          _
      $region28: #{tpu_custom_call.1} parent=5 // pred_fallthru
        _
      %p241 = scmp.le.s32.totalorder 1, %s19
      %p242 = scmp.lt.s32.totalorder %s19, 5
      %p243 = pnand %p241, %p242
      %p244 = pneg %p243
      // Predicated region
      $region37: #{tpu_custom_call.1} parent=5 // pred_check
        _
      $region38: #{tpu_custom_call.1} parent=5 // pred_check_branch
        %246 = sbr.rel (%p243) target = $region40
      $region39: #{tpu_custom_call.1} parent=5 // pred_region
        %s247 = ssub.s32 %s19, 1
        %s248 = sand.u32 %s32, 1
        %s249 = scalar_lea.sflag [#allocation7], %s248
        %s250 = sand.u32 %s32, 1
        %s251 = smul.addr %s250, 16
        %s252 = scalar_lea.vmem [#allocation6], %s251
        // Predicated region
        $region41: #{tpu_custom_call.1} parent=39 // pred_check
          %p253 = pneg %p45
        $region42: #{tpu_custom_call.1} parent=39 // pred_check_branch
          %255 = sbr.rel (%p253) target = $region44
        $region43: #{tpu_custom_call.1} parent=39 // pred_region
          %256 = dma.done %s249, 256
        $region44: #{tpu_custom_call.1} parent=39 // pred_fallthru
          _
        %s257 = sand.u32 %s24, 1
        %s258 = scalar_lea.sflag [#allocation10], %s257
        %s259 = sand.u32 %s60, 1
        %s260 = smul.addr %s259, 16
        %s261 = scalar_lea.vmem [#allocation9], %s260
        // Predicated region
        $region45: #{tpu_custom_call.1} parent=39 // pred_check
          %p262 = pneg %p73
        $region46: #{tpu_custom_call.1} parent=39 // pred_check_branch
          %264 = sbr.rel (%p262) target = $region48
        $region47: #{tpu_custom_call.1} parent=39 // pred_region
          %265 = dma.done %s258, 256
        $region48: #{tpu_custom_call.1} parent=39 // pred_fallthru
          _
        // Predicated region
        $region49: #{tpu_custom_call.1} parent=39 // pred_check
          %p266 = pneg %p94
        $region50: #{tpu_custom_call.1} parent=39 // pred_check_branch
          %268 = sbr.rel (%p266) target = $region52
        $region51: #{tpu_custom_call.1} parent=39 // pred_region
          %269 = dma.done [#allocation10], 2048
        $region52: #{tpu_custom_call.1} parent=39 // pred_fallthru
          _
        %s270 = sand.u32 %s32, 1
        %s271 = scalar_lea.sflag [#allocation7], %s270
        %s272 = sand.u32 %s32, 1
        %s273 = smul.addr %s272, 16
        %s274 = scalar_lea.vmem [#allocation6], %s273
        %p275 = pneg %p45
        %p276 = pneg %p42
        %s277 = sand.u32 %s24, 1
        %s278 = scalar_lea.sflag [#allocation10], %s277
        %s279 = sand.u32 %s60, 1
        %s280 = smul.addr %s279, 16
        %s281 = scalar_lea.vmem [#allocation9], %s280
        %p282 = pneg %p73
        %p283 = pneg %p70
        %p284 = pneg %p94
        %p285 = pneg %p91
        %p286 = pneg %p115
        %p287 = pneg %p112
        %p288 = pneg %p136
        %p289 = pneg %p133
        %p290 = pneg %p157
        %p291 = pneg %p154
        %s292 = smul.u32 2, %s24
        %s293 = ssub.s32 3, %s24
        %s294 = smul.u32 2, %s293
        %p295 = scmp.eq.s32.totalorder %s24, 0
        // Predicated region
        $region53: #{tpu_custom_call.1} parent=39 // pred_check
          %p296 = pneg %p295
        $region54: #{tpu_custom_call.1} parent=39 // pred_check_branch
          %298 = sbr.rel (%p296) target = $region56
        $region55: #{tpu_custom_call.1} parent=39 // pred_region
          %vm299 = vcmask 523264
          %300 = vst.msk [vmem:[#allocation2] sm:$0xff] %vm299, 0.0
          %vm301 = vcmask 261120
          %302 = vst.msk [vmem:[#allocation3] sm:$0xff] %vm301, 0.0
          %303 = vst.msk [vmem:[#allocation4] sm:$0xff] %vm301, 0.0
        $region56: #{tpu_custom_call.1} parent=39 // pred_fallthru
          _
        %v304 = vld [vmem:[#allocation11] sm:$0xff]
        %v305 = vld [vmem:[#allocation11 + $0x8] sm:$0xff]
        %v306 = vld [vmem:[#allocation11 + $0x10] sm:$0xff]
        %v307 = vld [vmem:[#allocation11 + $0x18] sm:$0xff]
        %v308 = vld [vmem:[#allocation11 + $0x20] sm:$0xff]
        %v309 = vld [vmem:[#allocation11 + $0x28] sm:$0xff]
        %v310 = vld [vmem:[#allocation11 + $0x30] sm:$0xff]
        %v311 = vld [vmem:[#allocation11 + $0x38] sm:$0xff]
        %v312 = vld [vmem:[#allocation11 + $0x40] sm:$0xff]
        %v313 = vld [vmem:[#allocation11 + $0x48] sm:$0xff]
        %v314 = vld [vmem:[#allocation11 + $0x50] sm:$0xff]
        %v315 = vld [vmem:[#allocation11 + $0x58] sm:$0xff]
        %v316 = vld [vmem:[#allocation11 + $0x60] sm:$0xff]
        %v317 = vld [vmem:[#allocation11 + $0x68] sm:$0xff]
        %v318 = vld [vmem:[#allocation11 + $0x70] sm:$0xff]
        %v319 = vld [vmem:[#allocation11 + $0x78] sm:$0xff]
        %v320 = vld [vmem:[#allocation2] sm:$0xff]
        %v321 = vld [vmem:[#allocation3] sm:$0xff]
        %v322 = vld [vmem:[#allocation4] sm:$0xff]
        %vm323 = vcmask 523264
        %v325 = vsel %vm323, %v320, 0
        %327 = vmatprep.subr.mxu0 %v305
        %328 = vmatpush1.msra.mxu0 %v304
        %329 = vmatprep.subr.mxu0 %v307
        %330 = vmatpush1.msra.mxu0 %v306
        %331 = vmatprep.subr.mxu0 %v309
        %332 = vmatpush1.msra.mxu0 %v308
        %333 = vmatprep.subr.mxu0 %v311
        %334 = vmatpush1.msra.mxu0 %v310
        %335 = vmatprep.subr.mxu0 %v313
        %336 = vmatpush1.msra.mxu0 %v312
        %337 = vmatprep.subr.mxu0 %v315
        %338 = vmatpush1.msra.mxu0 %v314
        %339 = vmatprep.subr.mxu0 %v317
        %340 = vmatpush1.msra.mxu0 %v316
        %341 = vmatprep.subr.mxu0 %v319
        %342 = vmatpush1.msra.mxu0 %v318
        %343 = vmatprep.subr.mxu0 0.0
        %344 = vmatpush1.msra.mxu0 0.0
        %345 = vmatprep.subr.mxu0 0.0
        %346 = vmatpush1.msra.mxu0 0.0
        %347 = vmatprep.subr.mxu0 0.0
        %348 = vmatpush1.msra.mxu0 0.0
        %349 = vmatprep.subr.mxu0 0.0
        %350 = vmatpush1.msra.mxu0 0.0
        %351 = vmatprep.subr.mxu0 0.0
        %352 = vmatpush1.msra.mxu0 0.0
        %353 = vmatprep.subr.mxu0 0.0
        %354 = vmatpush1.msra.mxu0 0.0
        %355 = vmatprep.subr.mxu0 0.0
        %356 = vmatpush1.msra.mxu0 0.0
        %357 = vmatprep.subr.mxu0 0.0
        %358 = vmatpush1.msra.mxu0 0.0
        %359 = vmatprep.subr.mxu0 0.0
        %360 = vmatpush1.msra.mxu0 0.0
        %361 = vmatprep.subr.mxu0 0.0
        %362 = vmatpush1.msra.mxu0 0.0
        %363 = vmatprep.subr.mxu0 0.0
        %364 = vmatpush1.msra.mxu0 0.0
        %365 = vmatprep.subr.mxu0 0.0
        %366 = vmatpush1.msra.mxu0 0.0
        %367 = vmatprep.subr.mxu0 0.0
        %368 = vmatpush1.msra.mxu0 0.0
        %369 = vmatprep.subr.mxu0 0.0
        %370 = vmatpush1.msra.mxu0 0.0
        %371 = vmatprep.subr.mxu0 0.0
        %372 = vmatpush1.msra.mxu0 0.0
        %373 = vmatprep.subr.mxu0 0.0
        %374 = vmatpush1.msra.mxu0 0.0
        %375 = vmatprep.subr.mxu0 0.0
        %376 = vmatpush1.msra.mxu0 0.0
        %377 = vmatprep.subr.mxu0 0.0
        %378 = vmatpush1.msra.mxu0 0.0
        %379 = vmatprep.subr.mxu0 0.0
        %380 = vmatpush1.msra.mxu0 0.0
        %381 = vmatprep.subr.mxu0 0.0
        %382 = vmatpush1.msra.mxu0 0.0
        %383 = vmatprep.subr.mxu0 0.0
        %384 = vmatpush1.msra.mxu0 0.0
        %385 = vmatprep.subr.mxu0 0.0
        %386 = vmatpush1.msra.mxu0 0.0
        %387 = vmatprep.subr.mxu0 0.0
        %388 = vmatpush1.msra.mxu0 0.0
        %389 = vmatprep.subr.mxu0 0.0
        %390 = vmatpush1.msra.mxu0 0.0
        %391 = vmatprep.mubr.f32.mxu0 0.0
        %392 = vmatmul.mubr.f32.gmra.mrb[0].mxu0 %v325
        %v393 = vpop.f32.mrb[0].mxu0
        %v394 = vadd.f32 0.0, %v393
        %v395 = vpop.f32.mrb[0].mxu0
        %v396 = vadd.f32 0.0, %v395
        %397 = vdwg.mxu0
        %v398 = vld [vmem:[%s252] sm:$0xff]
        %v399 = vadd.f32 %v398, %v394
        %s400 = scalar_lea.vmem %s261, 8 [#allocation9]
        %v401 = vld [vmem:[%s400] sm:$0xff]
        %v402 = vadd.f32 %v401, %v396
        %v403 = vxor.u32 %v399, 2147483648
        %v404 = vmul.f32 %v403, 1.442695
        %v405 = vpow.pop %v404
        %v406 = vadd.f32 %v405, 1.0
        %v407 = vrcp.pop %v406
        %v408 = vmul.f32 1.0, %v407
        %v409 = vtanh.pop %v399
        %411 = vrot.lane.b32.xlu0 %v321, 32
        %v412 = vpop.permute.xlu0 %411
        %v414 = vmul.f32 %v408, %v412
        %416 = vrot.lane.b32.xlu0 %v409, 32
        %v417 = vpop.permute.xlu0 %416
        %v419 = vmul.f32 %v408, %v417
        %421 = vrot.lane.b32.xlu0 %v419, 32
        %v422 = vpop.permute.xlu0 %421
        %v424 = vadd.f32 %v414, %v422
        %v425 = vtanh.pop %v424
        %427 = vrot.lane.b32.xlu0 %v425, 32
        %v428 = vpop.permute.xlu0 %427
        %v430 = vmul.f32 %v408, %v428
        %v431 = vxor.u32 %v402, 2147483648
        %v432 = vmul.f32 %v431, 1.442695
        %v433 = vpow.pop %v432
        %v434 = vadd.f32 %v433, 1.0
        %v435 = vrcp.pop %v434
        %v436 = vmul.f32 1.0, %v435
        %v437 = vtanh.pop %v402
        %439 = vrot.lane.b32.xlu0 %v322, 32
        %v440 = vpop.permute.xlu0 %439
        %v442 = vmul.f32 %v436, %v440
        %444 = vrot.lane.b32.xlu0 %v437, 32
        %v445 = vpop.permute.xlu0 %444
        %v447 = vmul.f32 %v436, %v445
        %449 = vrot.lane.b32.xlu0 %v447, 32
        %v450 = vpop.permute.xlu0 %449
        %v452 = vadd.f32 %v442, %v450
        %v453 = vtanh.pop %v452
        %455 = vrot.lane.b32.xlu0 %v453, 32
        %v456 = vpop.permute.xlu0 %455
        %v458 = vmul.f32 %v436, %v456
        %460 = vrot.lane.b32.xlu0 %v430, 64
        %v461 = vpop.permute.xlu0 %460
        %464 = vrot.lane.b32.xlu0 %v458, 96
        %v465 = vpop.permute.xlu0 %464
        %vm467 = vcmask 261120
        %v468 = vsel %vm467, %v461, %v465
        %v470 = vsel %vm323, %v468, 0
        %472 = vmatprep.subr.mxu0 %v305
        %473 = vmatpush1.msra.mxu0 %v304
        %474 = vmatprep.subr.mxu0 %v307
        %475 = vmatpush1.msra.mxu0 %v306
        %476 = vmatprep.subr.mxu0 %v309
        %477 = vmatpush1.msra.mxu0 %v308
        %478 = vmatprep.subr.mxu0 %v311
        %479 = vmatpush1.msra.mxu0 %v310
        %480 = vmatprep.subr.mxu0 %v313
        %481 = vmatpush1.msra.mxu0 %v312
        %482 = vmatprep.subr.mxu0 %v315
        %483 = vmatpush1.msra.mxu0 %v314
        %484 = vmatprep.subr.mxu0 %v317
        %485 = vmatpush1.msra.mxu0 %v316
        %486 = vmatprep.subr.mxu0 %v319
        %487 = vmatpush1.msra.mxu0 %v318
        %488 = vmatprep.subr.mxu0 0.0
        %489 = vmatpush1.msra.mxu0 0.0
        %490 = vmatprep.subr.mxu0 0.0
        %491 = vmatpush1.msra.mxu0 0.0
        %492 = vmatprep.subr.mxu0 0.0
        %493 = vmatpush1.msra.mxu0 0.0
        %494 = vmatprep.subr.mxu0 0.0
        %495 = vmatpush1.msra.mxu0 0.0
        %496 = vmatprep.subr.mxu0 0.0
        %497 = vmatpush1.msra.mxu0 0.0
        %498 = vmatprep.subr.mxu0 0.0
        %499 = vmatpush1.msra.mxu0 0.0
        %500 = vmatprep.subr.mxu0 0.0
        %501 = vmatpush1.msra.mxu0 0.0
        %502 = vmatprep.subr.mxu0 0.0
        %503 = vmatpush1.msra.mxu0 0.0
        %504 = vmatprep.subr.mxu0 0.0
        %505 = vmatpush1.msra.mxu0 0.0
        %506 = vmatprep.subr.mxu0 0.0
        %507 = vmatpush1.msra.mxu0 0.0
        %508 = vmatprep.subr.mxu0 0.0
        %509 = vmatpush1.msra.mxu0 0.0
        %510 = vmatprep.subr.mxu0 0.0
        %511 = vmatpush1.msra.mxu0 0.0
        %512 = vmatprep.subr.mxu0 0.0
        %513 = vmatpush1.msra.mxu0 0.0
        %514 = vmatprep.subr.mxu0 0.0
        %515 = vmatpush1.msra.mxu0 0.0
        %516 = vmatprep.subr.mxu0 0.0
        %517 = vmatpush1.msra.mxu0 0.0
        %518 = vmatprep.subr.mxu0 0.0
        %519 = vmatpush1.msra.mxu0 0.0
        %520 = vmatprep.subr.mxu0 0.0
        %521 = vmatpush1.msra.mxu0 0.0
        %522 = vmatprep.subr.mxu0 0.0
        %523 = vmatpush1.msra.mxu0 0.0
        %524 = vmatprep.subr.mxu0 0.0
        %525 = vmatpush1.msra.mxu0 0.0
        %526 = vmatprep.subr.mxu0 0.0
        %527 = vmatpush1.msra.mxu0 0.0
        %528 = vmatprep.subr.mxu0 0.0
        %529 = vmatpush1.msra.mxu0 0.0
        %530 = vmatprep.subr.mxu0 0.0
        %531 = vmatpush1.msra.mxu0 0.0
        %532 = vmatprep.subr.mxu0 0.0
        %533 = vmatpush1.msra.mxu0 0.0
        %534 = vmatprep.subr.mxu0 0.0
        %535 = vmatpush1.msra.mxu0 0.0
        %536 = vmatprep.mubr.f32.mxu0 0.0
        %537 = vmatmul.mubr.f32.gmra.mrb[0].mxu0 %v470
        %v538 = vpop.f32.mrb[0].mxu0
        %v539 = vadd.f32 0.0, %v538
        %v540 = vpop.f32.mrb[0].mxu0
        %v541 = vadd.f32 0.0, %v540
        %542 = vdwg.mxu0
        %s543 = scalar_lea.vmem %s252, 8 [#allocation6]
        %v544 = vld [vmem:[%s543] sm:$0xff]
        %v545 = vadd.f32 %v544, %v539
        %v546 = vld [vmem:[%s261] sm:$0xff]
        %v547 = vadd.f32 %v546, %v541
        %v548 = vxor.u32 %v545, 2147483648
        %v549 = vmul.f32 %v548, 1.442695
        %v550 = vpow.pop %v549
        %v551 = vadd.f32 %v550, 1.0
        %v552 = vrcp.pop %v551
        %v553 = vmul.f32 1.0, %v552
        %v554 = vtanh.pop %v545
        %v555 = vmul.f32 %v553, %v424
        %557 = vrot.lane.b32.xlu0 %v554, 32
        %v558 = vpop.permute.xlu0 %557
        %v560 = vmul.f32 %v553, %v558
        %562 = vrot.lane.b32.xlu0 %v560, 32
        %v563 = vpop.permute.xlu0 %562
        %v565 = vadd.f32 %v555, %v563
        %v566 = vtanh.pop %v565
        %568 = vrot.lane.b32.xlu0 %v566, 32
        %v569 = vpop.permute.xlu0 %568
        %v571 = vmul.f32 %v553, %v569
        %v572 = vxor.u32 %v547, 2147483648
        %v573 = vmul.f32 %v572, 1.442695
        %v574 = vpow.pop %v573
        %v575 = vadd.f32 %v574, 1.0
        %v576 = vrcp.pop %v575
        %v577 = vmul.f32 1.0, %v576
        %v578 = vtanh.pop %v547
        %v579 = vmul.f32 %v577, %v452
        %581 = vrot.lane.b32.xlu0 %v578, 32
        %v582 = vpop.permute.xlu0 %581
        %v584 = vmul.f32 %v577, %v582
        %586 = vrot.lane.b32.xlu0 %v584, 32
        %v587 = vpop.permute.xlu0 %586
        %v589 = vadd.f32 %v579, %v587
        %v590 = vtanh.pop %v589
        %592 = vrot.lane.b32.xlu0 %v590, 32
        %v593 = vpop.permute.xlu0 %592
        %v595 = vmul.f32 %v577, %v593
        %597 = vrot.lane.b32.xlu0 %v571, 64
        %v598 = vpop.permute.xlu0 %597
        %601 = vrot.lane.b32.xlu0 %v595, 96
        %v602 = vpop.permute.xlu0 %601
        %v604 = vsel %vm467, %v598, %v602
        %605 = vst.msk [vmem:[#allocation2] sm:$0xff] %vm323, %v604
        %607 = vrot.lane.b32.xlu0 %v565, 96
        %v608 = vpop.permute.xlu0 %607
        %610 = vst.msk [vmem:[#allocation3] sm:$0xff] %vm467, %v608
        %612 = vrot.lane.b32.xlu0 %v589, 96
        %v613 = vpop.permute.xlu0 %612
        %615 = vst.msk [vmem:[#allocation4] sm:$0xff] %vm467, %v613
        %p616 = scmp.eq.s32.totalorder %s24, 3
        // Predicated region
        $region57: #{tpu_custom_call.1} parent=39 // pred_check
          %p617 = pneg %p616
        $region58: #{tpu_custom_call.1} parent=39 // pred_check_branch
          %619 = sbr.rel (%p617) target = $region60
        $region59: #{tpu_custom_call.1} parent=39 // pred_region
          %v620 = vld [vmem:[%s3] sm:$0x1]
          %v621 = vlaneseq
          %v622 = vshrl.u32 %v621, 7
          %v623 = vsub.s32 0, %v622
          %v624 = vrot.slane %v620, %v623
          %v625 = vmul.f32 %v604, %v624
          %v626 = vsel %vm467, %v625, 0.0
          %627 = vadd.xlane.f32.xlu0 %v626
          %v628 = vpop.xlane.xlu0 %627
          %v629 = vld [vmem:[%s3 + $0x1] sm:$0x1]
          %v630 = vlaneseq
          %v631 = vshrl.u32 %v630, 7
          %v632 = vsub.s32 0, %v631
          %v633 = vrot.slane %v629, %v632
          %635 = vrot.lane.b32.xlu0 %v633, 32
          %v636 = vpop.permute.xlu0 %635
          %v638 = vmul.f32 %v604, %v636
          %640 = vrot.lane.b32.xlu0 %v638, 96
          %v641 = vpop.permute.xlu0 %640
          %v643 = vsel %vm467, %v641, 0.0
          %644 = vadd.xlane.f32.xlu0 %v643
          %v645 = vpop.xlane.xlu0 %644
          %v646 = vadd.f32 %v628, %v645
          %s647 = sld [smem:[#allocation5]]
          %v648 = vstv %s647
          %v649 = vadd.f32 %v646, %v648
          %v650 = vxor.u32 %v649, 2147483648
          %v651 = vmul.f32 %v650, 1.442695
          %v652 = vpow.pop %v651
          %v653 = vadd.f32 %v652, 1.0
          %v654 = vrcp.pop %v653
          %v655 = vmul.f32 1.0, %v654
          %656 = vst [vmem:[#allocation12] sm:$0xff] %v655
        $region60: #{tpu_custom_call.1} parent=39 // pred_fallthru
          _
        // Predicated region
        $region61: #{tpu_custom_call.1} parent=39 // pred_check
          %p657 = pneg %p154
        $region62: #{tpu_custom_call.1} parent=39 // pred_check_branch
          %659 = sbr.rel (%p657) target = $region64
        $region63: #{tpu_custom_call.1} parent=39 // pred_region
          %s661 = ssub.s32 128, 128
          %662 = vsyncadd [#allocation8], %s661
          %s664 = sshll.u32 [#allocation12], 4
          %s665 = int_to_ptr.vmem [resolvable:$true] %s664
          %667 = dma.vmem_to_hbm [thread:$0]  %s665, 128, %s5, [#allocation8]
        $region64: #{tpu_custom_call.1} parent=39 // pred_fallthru
          _
        // Predicated region
        $region65: #{tpu_custom_call.1} parent=39 // pred_check
          %p668 = pneg %p154
        $region66: #{tpu_custom_call.1} parent=39 // pred_check_branch
          %670 = sbr.rel (%p668) target = $region68
        $region67: #{tpu_custom_call.1} parent=39 // pred_region
          %671 = dma.done [#allocation8], 128
        $region68: #{tpu_custom_call.1} parent=39 // pred_fallthru
          _
      $region40: #{tpu_custom_call.1} parent=5 // pred_fallthru
        _
      %p672 = scmp.le.s32.totalorder 2, %s19
      // Predicated region
      $region69: #{tpu_custom_call.1} parent=5 // pred_check
        %p673 = pneg %p672
      $region70: #{tpu_custom_call.1} parent=5 // pred_check_branch
        %675 = sbr.rel (%p673) target = $region72
      $region71: #{tpu_custom_call.1} parent=5 // pred_region
        %s676 = ssub.s32 %s19, 2
      $region72: #{tpu_custom_call.1} parent=5 // pred_fallthru
        _
    $region6: #{tpu_custom_call.1} parent=1 // loop_footer
      %s23 = sadd.s32 1, %s19
    $region7: #{tpu_custom_call.1} parent=1 // loop_footer_branch
      %18 = sbr.rel target = $region3
    $region8: #{tpu_custom_call.1} parent=1 // loop_exit
      _
    %677 = vsyncpa [#allocation7], 1
    %s678 = scalar_lea.sflag [#allocation7], 1
    %679 = vsyncpa %s678, 1
    %680 = vsyncpa [#allocation10], 1
    %s681 = scalar_lea.sflag [#allocation10], 1
    %682 = vsyncpa %s681, 1
    %683 = vsyncpa [#allocation8], 1
    %s684 = scalar_lea.sflag [#allocation8], 1
    %685 = vsyncpa %s684, 1

</llo_original>
